<compile_context>
chip_gen: v6e
topology: v6e:2x2x1
jax: 0.10.0
libtpu: 0.0.40
codegen_flags: <defaults>
</compile_context>

<pallas_src>
import functools

import jax
import jax.numpy as jnp
from jax.experimental import pallas as pl
from jax.experimental.pallas import tpu as pltpu


VMEM_SPEC = pl.BlockSpec(memory_space=pltpu.MemorySpace.VMEM)
OUT_LANES = 128   # lane-dense score output (scores live along the lane axis)
BF16 = jnp.bfloat16


# ------------------------------ in-kernel helpers --------------------------- #

def _oh_rows(idx_col, n_rows, n_cols):
    """out[r, c] = (idx_col[r, 0] == c); built directly in bf16 (MXU operand)."""
    c = jax.lax.broadcasted_iota(jnp.int32, (n_rows, n_cols), 1)
    return (idx_col == c).astype(BF16)


def _oh_cols(idx_row, n_rows, n_cols):
    """out[r, c] = (idx_row[0, c] == r); built directly in bf16 (MXU operand)."""
    r = jax.lax.broadcasted_iota(jnp.int32, (n_rows, n_cols), 0)
    return (idx_row == r).astype(BF16)


def _mxdot(a, b):
    """MXU matmul: bf16 inputs (no-op cast if already bf16), fp32 accumulation."""
    return jnp.dot(a.astype(BF16), b.astype(BF16),
                   preferred_element_type=jnp.float32)


# --------------------------------- fused kernel ----------------------------- #

def _ddi_fused_kernel(idx_col_ref, idx_row_ref, atom_feat_ref,
                      w_node_ref, w_steps_ref, w_ht_ref, bias_ref, out_ref,
                      *, nt, et, n_steps, d_hid, n_pairs, slot, out_lanes):
    p2 = 2 * n_pairs

    # ---- unpack packed indices (leading-axis reads + offset-0 truncations) ----
    atom_type = idx_col_ref[0][0:nt, :]        # (NT, 1)
    bond_type = idx_col_ref[1][0:et, :]        # (ET, 1)
    idx_j     = idx_col_ref[2][0:et, :]        # (ET, 1)
    dseg_all  = idx_col_ref[3][0:p2, :]        # (2P, 1)  [drug1 mols | drug2 mols]
    dseg_swap = idx_col_ref[4][0:p2, :]        # (2P, 1)  [drug2 mols | drug1 mols]
    seg_i = idx_row_ref[0][:, 0:et]            # (1, ET)
    seg_m = idx_row_ref[1][:, 0:nt]            # (1, NT)

    # ---- packed weights (bf16) / biases & constants (fp32) ----
    atom_tbl = w_node_ref[0]                   # (slot, d_hid)  atom_emb @ atom_proj fold
    w_feat   = w_node_ref[1]                   # (slot, d_hid)
    bond_tbl = w_node_ref[2]                   # (slot, d_hid)
    wh = w_ht_ref[0]                           # (d_hid, d_hid) w_read @ head_proj
    wt = w_ht_ref[1]                           # (d_hid, d_hid) w_read @ tail_proj
    b_atom = bias_ref[0]                       # (1, d_hid)
    c_vec  = bias_ref[n_steps + 1]             # (1, d_hid) b_read@(Wh-Wt) + se_vec

    # ---- initial node state: folded atom-embedding lookup + feature proj ----
    a_oh = _oh_rows(atom_type, nt, slot)                         # (NT, slot) bf16
    node = (_mxdot(a_oh, atom_tbl)
            + _mxdot(atom_feat_ref[...], w_feat)
            + b_atom)                                            # (NT, d_hid) f32

    # ---- loop-invariant adjacency & edge aggregate (off node's critical chain) ----
    b_oh = _oh_rows(bond_type, et, slot)                         # (ET, slot) bf16
    edge = _mxdot(b_oh, bond_tbl)                                # (ET, d_hid) f32
    gather  = _oh_rows(idx_j, et, nt)                            # (ET, NT) bf16
    scatter = _oh_cols(seg_i, nt, et)                            # (NT, ET) bf16
    adj = _mxdot(scatter, gather).astype(BF16)                   # (NT, NT) edge counts
    edge_agg = _mxdot(scatter, edge)                             # (NT, d_hid) f32

    # ---- residual message passing: 2 matmuls / step, node stays in VMEM ----
    # TODO(synk): co-attention between the two graphs (out_seg_i/out_idx_j) omitted.
    for s in range(n_steps):
        agg = _mxdot(adj, node) + edge_agg                       # (NT, d_hid)
        upd = _mxdot(agg, w_steps_ref[s]) + bias_ref[1 + s]
        node = node + jnp.maximum(upd, 0.0)

    # ---- fused readout + drug_se_seg selection + head/tail proj + trans score ----
    sel      = (dseg_all == seg_m).astype(BF16)                  # (2P, NT)
    sel_swap = (dseg_swap == seg_m).astype(BF16)                 # (2P, NT)
    d_all  = _mxdot(sel, node)                                   # rows: [d1 ; d2]
    d_swap = _mxdot(sel_swap, node)                              # rows: [d2 ; d1]
    # rows 0..P-1: head(d1) + rel - tail(d2) ; rows P..2P-1: head(d2) + rel - tail(d1)
    diff = _mxdot(d_all, wh) - _mxdot(d_swap, wt) + c_vec        # (2P, d_hid) f32
    norms = jnp.sqrt(jnp.sum(diff * diff, axis=1, keepdims=True))  # (2P, 1)

    # ---- lane-dense output: out[0, p] = norms[p] + norms[p + P] for p < P ----
    rr = jax.lax.broadcasted_iota(jnp.int32, (p2, out_lanes), 0)
    cc = jax.lax.broadcasted_iota(jnp.int32, (p2, out_lanes), 1)
    place = (((rr == cc) | (rr == cc + n_pairs)) & (cc < n_pairs)).astype(jnp.float32)
    out_ref[...] = jnp.sum(norms * place, axis=0, keepdims=True)  # (1, out_lanes)


# --------------------------- model forward (wrapper) ------------------------ #

def _round_up(x, m):
    return ((x + m - 1) // m) * m


def ddi_forward(params,
                seg_m1, atom_type1, atom_feat1, bond_type1,
                inn_seg_i1, inn_idx_j1, out_seg_i1, out_idx_j1,
                seg_m2, atom_type2, atom_feat2, bond_type2,
                inn_seg_i2, inn_idx_j2, out_seg_i2, out_idx_j2,
                se_idx, drug_se_seg, n_mol):
    del out_seg_i1, out_idx_j1, out_seg_i2, out_idx_j2  # see TODO(synk) in kernel
    i32, f32 = jnp.int32, jnp.float32

    n1, n2 = atom_type1.shape[0], atom_type2.shape[0]
    e1, e2 = bond_type1.shape[0], bond_type2.shape[0]
    nt, et = n1 + n2, e1 + e2
    n_pairs = drug_se_seg.shape[0]
    assert n_pairs <= OUT_LANES

    d_node = params["atom_emb_w"].shape[1]
    d_hid = params["head_proj_w"].shape[0]
    n_steps = params["w_steps"].shape[0]
    n_atom_type = params["atom_emb_w"].shape[0]
    n_bond_type = params["bond_emb_w"].shape[0]
    d_atom_feat = atom_feat1.shape[1]
    assert d_node == d_hid                          # simplified encoder assumption
    assert params["bond_emb_w"].shape[1] == d_hid   # simplified encoder assumption

    # ---------------- index packing: 6 tiny DMAs -> 2 ----------------
    # (out-of-range indices would silently produce all-zero one-hot rows.)
    atom_type = jnp.concatenate([atom_type1, atom_type2]).astype(i32)
    bond_type = jnp.concatenate([bond_type1, bond_type2]).astype(i32)
    idx_j = jnp.concatenate([inn_idx_j1, inn_idx_j2 + n1]).astype(i32)
    seg_i = jnp.concatenate([inn_seg_i1, inn_seg_i2 + n1]).astype(i32)
    seg_m = jnp.concatenate([seg_m1, seg_m2 + n_mol]).astype(i32)
    dseg = drug_se_seg.astype(i32)
    dseg_all = jnp.concatenate([dseg, dseg + n_mol])
    dseg_swap = jnp.concatenate([dseg + n_mol, dseg])

    lc = _round_up(max(nt, et, 2 * n_pairs), 8)

    def _col(v):
        return jnp.pad(v, (0, lc - v.shape[0])).reshape(1, lc, 1)

    idx_col = jnp.concatenate(
        [_col(atom_type), _col(bond_type), _col(idx_j),
         _col(dseg_all), _col(dseg_swap)], axis=0)                    # (5, lc, 1)

    lr = _round_up(max(nt, et), 128)

    def _row(v):
        return jnp.pad(v, (0, lr - v.shape[0]),
                       constant_values=-1).reshape(1, 1, lr)

    idx_row = jnp.concatenate([_row(seg_i), _row(seg_m)], axis=0)     # (2, 1, lr)

    # ---------------- weight folds (all bf16) ----------------
    slot = _round_up(max(n_atom_type, n_bond_type, d_atom_feat), 16)

    w_emb = params["atom_proj_w"][:d_node, :]
    w_feat = params["atom_proj_w"][d_node:, :]
    atom_tbl_fold = params["atom_emb_w"] @ w_emb                      # (n_atom_type, d_hid)

    w_node = jnp.zeros((3, slot, d_hid), f32)
    w_node = w_node.at[0, :n_atom_type].set(atom_tbl_fold)
    w_node = w_node.at[1, :d_atom_feat].set(w_feat)
    w_node = w_node.at[2, :n_bond_type].set(params["bond_emb_w"])
    w_node = w_node.astype(BF16)                                      # (3, slot, d_hid)

    atom_feat = jnp.concatenate([atom_feat1, atom_feat2], axis=0).astype(f32)
    atom_feat = jnp.pad(atom_feat,
                        ((0, 0), (0, slot - d_atom_feat))).astype(BF16)  # (NT, slot)

    w_steps_bf = params["w_steps"].astype(BF16)                       # (n_steps, d_hid, d_hid)

    w_ht = jnp.stack([params["w_read"] @ params["head_proj_w"],
                      params["w_read"] @ params["tail_proj_w"]],
                     axis=0).astype(BF16)                             # (2, d_hid, d_hid)

    se_vec = params["side_effect_emb_w"][se_idx].reshape(1, d_hid)
    c_vec = (params["b_read"].reshape(1, -1)
             @ (params["head_proj_w"] - params["tail_proj_w"]) + se_vec)  # (1, d_hid)

    bias_pack = jnp.concatenate(
        [params["atom_proj_b"].reshape(1, 1, d_hid),
         params["b_steps"].reshape(n_steps, 1, d_hid),
         c_vec.reshape(1, 1, d_hid)], axis=0).astype(f32)             # (n_steps+2, 1, d_hid)

    kernel = functools.partial(
        _ddi_fused_kernel,
        nt=nt, et=et, n_steps=n_steps, d_hid=d_hid, n_pairs=n_pairs,
        slot=slot, out_lanes=OUT_LANES)

    call_args = (idx_col, idx_row, atom_feat, w_node, w_steps_bf, w_ht, bias_pack)

    # explicit VMEM budget: inputs + in-kernel intermediates, generous headroom
    input_bytes = sum(int(x.size) * x.dtype.itemsize for x in call_args)
    inter_bytes = (2 * (2 * nt * et + nt * nt + (nt + et) * slot + 4 * n_pairs * nt)
                   + 4 * (6 * nt * d_hid + 2 * et * d_hid + 4 * n_pairs * d_hid))
    vmem_limit = int(min(96 << 20, max(16 << 20, 4 * (input_bytes + inter_bytes))))

    # advisory cost estimate (matmul-dominated)
    flops = 2 * (2 * nt * slot * d_hid + et * slot * d_hid
                 + nt * et * nt + nt * et * d_hid
                 + n_steps * (nt * nt * d_hid + nt * d_hid * d_hid)
                 + 4 * n_pairs * nt * d_hid + 4 * n_pairs * d_hid * d_hid)
    bytes_accessed = input_bytes + 4 * OUT_LANES

    out = pl.pallas_call(
        kernel,
        out_shape=jax.ShapeDtypeStruct((1, OUT_LANES), jnp.float32),
        in_specs=[VMEM_SPEC] * len(call_args),
        out_specs=VMEM_SPEC,
        compiler_params=pltpu.CompilerParams(vmem_limit_bytes=vmem_limit),
        cost_estimate=pl.CostEstimate(flops=flops,
                                      transcendentals=2 * n_pairs,
                                      bytes_accessed=bytes_accessed),
    )(*call_args)

    return out[0, :n_pairs]   # lane-dense -> (P,)


# ------------------------------------ driver -------------------------------- #

if __name__ == "__main__":
    # Small config consistent with the module's __init__.
    n_atom_type, n_bond_type = 16, 8
    d_node = d_hid = d_edge = d_readout = 32   # d_readout == d_hid (head_proj input)
    d_atom_feat = 4
    n_prop_step = 2
    n_side_effect = 4

    B = 2          # molecules per drug side
    N = 16         # atoms per side
    E = 24         # bonds per side
    P = 2          # drug-pair rows selected by drug_se_seg

    key = jax.random.PRNGKey(0)
    kit = iter(list(jax.random.split(key, 32)))

    def nrm(shape, scale=0.1):
        return scale * jax.random.normal(next(kit), shape, dtype=jnp.float32)

    def rint(lo, hi, shape):
        return jax.random.randint(next(kit), shape, lo, hi, dtype=jnp.int32)

    params = {
        # embeddings (padding_idx=0 -> row 0 zeroed)
        "atom_emb_w": nrm((n_atom_type, d_node)).at[0].set(0.0),
        "bond_emb_w": nrm((n_bond_type, d_edge)).at[0].set(0.0),
        "side_effect_emb_w": nrm((n_side_effect, d_hid)),
        # atom_proj: Linear(d_node + d_atom_feat, d_node)  (in x out layout)
        "atom_proj_w": nrm((d_node + d_atom_feat, d_node)),
        "atom_proj_b": nrm((d_node,)),
        # simplified encoder weights (stacked per prop step) + readout projection
        "w_steps": nrm((n_prop_step, d_hid, d_hid)),
        "b_steps": nrm((n_prop_step, 1, d_hid)),
        "w_read": nrm((d_hid, d_readout)),
        "b_read": nrm((d_readout,)),
        # head/tail projections: Linear(d_hid, d_hid, bias=False)
        "head_proj_w": nrm((d_hid, d_hid)),
        "tail_proj_w": nrm((d_hid, d_hid)),
    }

    # drug 1
    seg_m1 = jnp.repeat(jnp.arange(B, dtype=jnp.int32), N // B)
    atom_type1 = rint(1, n_atom_type, (N,))
    atom_feat1 = nrm((N, d_atom_feat), scale=1.0)
    bond_type1 = rint(1, n_bond_type, (E,))
    inn_seg_i1 = rint(0, N, (E,))
    inn_idx_j1 = rint(0, N, (E,))
    out_seg_i1 = rint(0, N, (E,))
    out_idx_j1 = rint(0, N, (E,))
    # drug 2
    seg_m2 = jnp.repeat(jnp.arange(B, dtype=jnp.int32), N // B)
    atom_type2 = rint(1, n_atom_type, (N,))
    atom_feat2 = nrm((N, d_atom_feat), scale=1.0)
    bond_type2 = rint(1, n_bond_type, (E,))
    inn_seg_i2 = rint(0, N, (E,))
    inn_idx_j2 = rint(0, N, (E,))
    out_seg_i2 = rint(0, N, (E,))
    out_idx_j2 = rint(0, N, (E,))

    drug_se_seg = jnp.arange(P, dtype=jnp.int32)
    se_idx = 0

    fwd = jax.jit(ddi_forward, static_argnames=("se_idx", "n_mol"))
    score = fwd(params,
                seg_m1, atom_type1, atom_feat1, bond_type1,
                inn_seg_i1, inn_idx_j1, out_seg_i1, out_idx_j1,
                seg_m2, atom_type2, atom_feat2, bond_type2,
                inn_seg_i2, inn_idx_j2, out_seg_i2, out_idx_j2,
                se_idx=se_idx, drug_se_seg=drug_se_seg, n_mol=B)
    score = jax.block_until_ready(score)
    assert score.shape == (P,) and score.dtype == jnp.float32
    assert bool(jnp.all(jnp.isfinite(score)))
    print("KERNEL_OK")
</pallas_src>

<mosaic_0001>
module attributes {stable_mosaic.version = 11 : i64} {
  func.func @_ddi_fused_kernel(%arg0: memref<5x48x1xi32, #tpu.memory_space<vmem>>, %arg1: memref<2x1x128xi32, #tpu.memory_space<vmem>>, %arg2: memref<32x16xbf16, #tpu.memory_space<vmem>>, %arg3: memref<3x16x32xbf16, #tpu.memory_space<vmem>>, %arg4: memref<2x32x32xbf16, #tpu.memory_space<vmem>>, %arg5: memref<2x32x32xbf16, #tpu.memory_space<vmem>>, %arg6: memref<4x1x32xf32, #tpu.memory_space<vmem>>, %arg7: memref<1x128xf32, #tpu.memory_space<vmem>>) attributes {dimension_semantics = [], scalar_prefetch = 0 : i64, scratch_operands = 0 : i64, tpu.core_type = #tpu.core_type<tc>} {
    %c0 = arith.constant 0 : index
    %c0_0 = arith.constant 0 : index
    %c0_1 = arith.constant 0 : index
    %0 = vector.load %arg0[%c0, %c0_0, %c0_1] : memref<5x48x1xi32, #tpu.memory_space<vmem>>, vector<1x48x1xi32>
    %1 = vector.shape_cast %0 : vector<1x48x1xi32> to vector<48x1xi32>
    %2 = vector.extract_strided_slice %1 {offsets = [0, 0], sizes = [32, 1], strides = [1, 1]} : vector<48x1xi32> to vector<32x1xi32>
    %c1 = arith.constant 1 : index
    %c0_2 = arith.constant 0 : index
    %c0_3 = arith.constant 0 : index
    %3 = vector.load %arg0[%c1, %c0_2, %c0_3] : memref<5x48x1xi32, #tpu.memory_space<vmem>>, vector<1x48x1xi32>
    %4 = vector.shape_cast %3 : vector<1x48x1xi32> to vector<48x1xi32>
    %c2 = arith.constant 2 : index
    %c0_4 = arith.constant 0 : index
    %c0_5 = arith.constant 0 : index
    %5 = vector.load %arg0[%c2, %c0_4, %c0_5] : memref<5x48x1xi32, #tpu.memory_space<vmem>>, vector<1x48x1xi32>
    %6 = vector.shape_cast %5 : vector<1x48x1xi32> to vector<48x1xi32>
    %c3 = arith.constant 3 : index
    %c0_6 = arith.constant 0 : index
    %c0_7 = arith.constant 0 : index
    %7 = vector.load %arg0[%c3, %c0_6, %c0_7] : memref<5x48x1xi32, #tpu.memory_space<vmem>>, vector<1x48x1xi32>
    %8 = vector.shape_cast %7 : vector<1x48x1xi32> to vector<48x1xi32>
    %9 = vector.extract_strided_slice %8 {offsets = [0, 0], sizes = [4, 1], strides = [1, 1]} : vector<48x1xi32> to vector<4x1xi32>
    %c4 = arith.constant 4 : index
    %c0_8 = arith.constant 0 : index
    %c0_9 = arith.constant 0 : index
    %10 = vector.load %arg0[%c4, %c0_8, %c0_9] : memref<5x48x1xi32, #tpu.memory_space<vmem>>, vector<1x48x1xi32>
    %11 = vector.shape_cast %10 : vector<1x48x1xi32> to vector<48x1xi32>
    %12 = vector.extract_strided_slice %11 {offsets = [0, 0], sizes = [4, 1], strides = [1, 1]} : vector<48x1xi32> to vector<4x1xi32>
    %c0_10 = arith.constant 0 : index
    %c0_11 = arith.constant 0 : index
    %c0_12 = arith.constant 0 : index
    %13 = vector.load %arg1[%c0_10, %c0_11, %c0_12] : memref<2x1x128xi32, #tpu.memory_space<vmem>>, vector<1x1x128xi32>
    %14 = vector.shape_cast %13 : vector<1x1x128xi32> to vector<1x128xi32>
    %15 = vector.extract_strided_slice %14 {offsets = [0, 0], sizes = [1, 48], strides = [1, 1]} : vector<1x128xi32> to vector<1x48xi32>
    %c1_13 = arith.constant 1 : index
    %c0_14 = arith.constant 0 : index
    %c0_15 = arith.constant 0 : index
    %16 = vector.load %arg1[%c1_13, %c0_14, %c0_15] : memref<2x1x128xi32, #tpu.memory_space<vmem>>, vector<1x1x128xi32>
    %17 = vector.shape_cast %16 : vector<1x1x128xi32> to vector<1x128xi32>
    %18 = vector.extract_strided_slice %17 {offsets = [0, 0], sizes = [1, 32], strides = [1, 1]} : vector<1x128xi32> to vector<1x32xi32>
    %c0_16 = arith.constant 0 : index
    %c0_17 = arith.constant 0 : index
    %c0_18 = arith.constant 0 : index
    %19 = vector.load %arg3[%c0_16, %c0_17, %c0_18] : memref<3x16x32xbf16, #tpu.memory_space<vmem>>, vector<1x16x32xbf16>
    %20 = vector.shape_cast %19 : vector<1x16x32xbf16> to vector<16x32xbf16>
    %c1_19 = arith.constant 1 : index
    %c0_20 = arith.constant 0 : index
    %c0_21 = arith.constant 0 : index
    %21 = vector.load %arg3[%c1_19, %c0_20, %c0_21] : memref<3x16x32xbf16, #tpu.memory_space<vmem>>, vector<1x16x32xbf16>
    %22 = vector.shape_cast %21 : vector<1x16x32xbf16> to vector<16x32xbf16>
    %c2_22 = arith.constant 2 : index
    %c0_23 = arith.constant 0 : index
    %c0_24 = arith.constant 0 : index
    %23 = vector.load %arg3[%c2_22, %c0_23, %c0_24] : memref<3x16x32xbf16, #tpu.memory_space<vmem>>, vector<1x16x32xbf16>
    %24 = vector.shape_cast %23 : vector<1x16x32xbf16> to vector<16x32xbf16>
    %c0_25 = arith.constant 0 : index
    %c0_26 = arith.constant 0 : index
    %c0_27 = arith.constant 0 : index
    %25 = vector.load %arg5[%c0_25, %c0_26, %c0_27] : memref<2x32x32xbf16, #tpu.memory_space<vmem>>, vector<1x32x32xbf16>
    %26 = vector.shape_cast %25 : vector<1x32x32xbf16> to vector<32x32xbf16>
    %c1_28 = arith.constant 1 : index
    %c0_29 = arith.constant 0 : index
    %c0_30 = arith.constant 0 : index
    %27 = vector.load %arg5[%c1_28, %c0_29, %c0_30] : memref<2x32x32xbf16, #tpu.memory_space<vmem>>, vector<1x32x32xbf16>
    %28 = vector.shape_cast %27 : vector<1x32x32xbf16> to vector<32x32xbf16>
    %c0_31 = arith.constant 0 : index
    %c0_32 = arith.constant 0 : index
    %c0_33 = arith.constant 0 : index
    %29 = vector.load %arg6[%c0_31, %c0_32, %c0_33] : memref<4x1x32xf32, #tpu.memory_space<vmem>>, vector<1x1x32xf32>
    %30 = vector.shape_cast %29 : vector<1x1x32xf32> to vector<1x32xf32>
    %c3_34 = arith.constant 3 : index
    %c0_35 = arith.constant 0 : index
    %c0_36 = arith.constant 0 : index
    %31 = vector.load %arg6[%c3_34, %c0_35, %c0_36] : memref<4x1x32xf32, #tpu.memory_space<vmem>>, vector<1x1x32xf32>
    %32 = vector.shape_cast %31 : vector<1x1x32xf32> to vector<1x32xf32>
    %33 = tpu.iota {dimensions = array<i32: 1>} : vector<32x16xi32>
    %34 = vector.broadcast %2 : vector<32x1xi32> to vector<32x16xi32>
    %35 = arith.cmpi eq, %34, %33 : vector<32x16xi32>
    %36 = arith.extui %35 : vector<32x16xi1> to vector<32x16xi32>
    %37 = arith.sitofp %36 : vector<32x16xi32> to vector<32x16xf32>
    %38 = arith.truncf %37 : vector<32x16xf32> to vector<32x16xbf16>
    %cst = arith.constant dense<0.000000e+00> : vector<32x32xf32>
    %39 = tpu.matmul %38, %20, %cst {dimension_numbers = #tpu.dot_dimension_numbers<[1], [0], [0], [1], [0, 0, 1, 1], [], []>} : vector<32x16xbf16>, vector<16x32xbf16>, vector<32x32xf32> -> vector<32x32xf32>
    %c0_37 = arith.constant 0 : index
    %c0_38 = arith.constant 0 : index
    %40 = vector.load %arg2[%c0_37, %c0_38] : memref<32x16xbf16, #tpu.memory_space<vmem>>, vector<32x16xbf16>
    %cst_39 = arith.constant dense<0.000000e+00> : vector<32x32xf32>
    %41 = tpu.matmul %40, %22, %cst_39 {dimension_numbers = #tpu.dot_dimension_numbers<[1], [0], [0], [1], [0, 0, 1, 1], [], []>} : vector<32x16xbf16>, vector<16x32xbf16>, vector<32x32xf32> -> vector<32x32xf32>
    %42 = arith.addf %39, %41 : vector<32x32xf32>
    %43 = vector.broadcast %30 : vector<1x32xf32> to vector<32x32xf32>
    %44 = arith.addf %42, %43 : vector<32x32xf32>
    %45 = tpu.iota {dimensions = array<i32: 1>} : vector<48x16xi32>
    %46 = vector.broadcast %4 : vector<48x1xi32> to vector<48x16xi32>
    %47 = arith.cmpi eq, %46, %45 : vector<48x16xi32>
    %48 = arith.extui %47 : vector<48x16xi1> to vector<48x16xi32>
    %49 = arith.sitofp %48 : vector<48x16xi32> to vector<48x16xf32>
    %50 = arith.truncf %49 : vector<48x16xf32> to vector<48x16xbf16>
    %cst_40 = arith.constant dense<0.000000e+00> : vector<48x32xf32>
    %51 = tpu.matmul %50, %24, %cst_40 {dimension_numbers = #tpu.dot_dimension_numbers<[1], [0], [0], [1], [0, 0, 1, 1], [], []>} : vector<48x16xbf16>, vector<16x32xbf16>, vector<48x32xf32> -> vector<48x32xf32>
    %52 = tpu.iota {dimensions = array<i32: 1>} : vector<48x32xi32>
    %53 = vector.broadcast %6 : vector<48x1xi32> to vector<48x32xi32>
    %54 = arith.cmpi eq, %53, %52 : vector<48x32xi32>
    %55 = arith.extui %54 : vector<48x32xi1> to vector<48x32xi32>
    %56 = arith.sitofp %55 : vector<48x32xi32> to vector<48x32xf32>
    %57 = arith.truncf %56 : vector<48x32xf32> to vector<48x32xbf16>
    %58 = tpu.iota {dimensions = array<i32: 0>} : vector<32x48xi32>
    %59 = vector.broadcast %15 : vector<1x48xi32> to vector<32x48xi32>
    %60 = arith.cmpi eq, %59, %58 : vector<32x48xi32>
    %61 = arith.extui %60 : vector<32x48xi1> to vector<32x48xi32>
    %62 = arith.sitofp %61 : vector<32x48xi32> to vector<32x48xf32>
    %63 = arith.truncf %62 : vector<32x48xf32> to vector<32x48xbf16>
    %cst_41 = arith.constant dense<0.000000e+00> : vector<32x32xf32>
    %64 = tpu.matmul %63, %57, %cst_41 {dimension_numbers = #tpu.dot_dimension_numbers<[1], [0], [0], [1], [0, 0, 1, 1], [], []>} : vector<32x48xbf16>, vector<48x32xbf16>, vector<32x32xf32> -> vector<32x32xf32>
    %65 = arith.truncf %64 : vector<32x32xf32> to vector<32x32xbf16>
    %66 = arith.truncf %51 : vector<48x32xf32> to vector<48x32xbf16>
    %cst_42 = arith.constant dense<0.000000e+00> : vector<32x32xf32>
    %67 = tpu.matmul %63, %66, %cst_42 {dimension_numbers = #tpu.dot_dimension_numbers<[1], [0], [0], [1], [0, 0, 1, 1], [], []>} : vector<32x48xbf16>, vector<48x32xbf16>, vector<32x32xf32> -> vector<32x32xf32>
    %68 = arith.truncf %44 : vector<32x32xf32> to vector<32x32xbf16>
    %cst_43 = arith.constant dense<0.000000e+00> : vector<32x32xf32>
    %69 = tpu.matmul %65, %68, %cst_43 {dimension_numbers = #tpu.dot_dimension_numbers<[1], [0], [0], [1], [0, 0, 1, 1], [], []>} : vector<32x32xbf16>, vector<32x32xbf16>, vector<32x32xf32> -> vector<32x32xf32>
    %70 = arith.addf %69, %67 : vector<32x32xf32>
    %c0_44 = arith.constant 0 : index
    %c0_45 = arith.constant 0 : index
    %c0_46 = arith.constant 0 : index
    %71 = vector.load %arg4[%c0_44, %c0_45, %c0_46] : memref<2x32x32xbf16, #tpu.memory_space<vmem>>, vector<1x32x32xbf16>
    %72 = vector.shape_cast %71 : vector<1x32x32xbf16> to vector<32x32xbf16>
    %73 = arith.truncf %70 : vector<32x32xf32> to vector<32x32xbf16>
    %cst_47 = arith.constant dense<0.000000e+00> : vector<32x32xf32>
    %74 = tpu.matmul %73, %72, %cst_47 {dimension_numbers = #tpu.dot_dimension_numbers<[1], [0], [0], [1], [0, 0, 1, 1], [], []>} : vector<32x32xbf16>, vector<32x32xbf16>, vector<32x32xf32> -> vector<32x32xf32>
    %c1_48 = arith.constant 1 : index
    %c0_49 = arith.constant 0 : index
    %c0_50 = arith.constant 0 : index
    %75 = vector.load %arg6[%c1_48, %c0_49, %c0_50] : memref<4x1x32xf32, #tpu.memory_space<vmem>>, vector<1x1x32xf32>
    %76 = vector.shape_cast %75 : vector<1x1x32xf32> to vector<1x32xf32>
    %77 = vector.broadcast %76 : vector<1x32xf32> to vector<32x32xf32>
    %78 = arith.addf %74, %77 : vector<32x32xf32>
    %cst_51 = arith.constant 0.000000e+00 : f32
    %79 = vector.broadcast %cst_51 : f32 to vector<32x32xf32>
    %80 = arith.maximumf %78, %79 : vector<32x32xf32>
    %81 = arith.addf %44, %80 : vector<32x32xf32>
    %82 = arith.truncf %81 : vector<32x32xf32> to vector<32x32xbf16>
    %cst_52 = arith.constant dense<0.000000e+00> : vector<32x32xf32>
    %83 = tpu.matmul %65, %82, %cst_52 {dimension_numbers = #tpu.dot_dimension_numbers<[1], [0], [0], [1], [0, 0, 1, 1], [], []>} : vector<32x32xbf16>, vector<32x32xbf16>, vector<32x32xf32> -> vector<32x32xf32>
    %84 = arith.addf %83, %67 : vector<32x32xf32>
    %c1_53 = arith.constant 1 : index
    %c0_54 = arith.constant 0 : index
    %c0_55 = arith.constant 0 : index
    %85 = vector.load %arg4[%c1_53, %c0_54, %c0_55] : memref<2x32x32xbf16, #tpu.memory_space<vmem>>, vector<1x32x32xbf16>
    %86 = vector.shape_cast %85 : vector<1x32x32xbf16> to vector<32x32xbf16>
    %87 = arith.truncf %84 : vector<32x32xf32> to vector<32x32xbf16>
    %cst_56 = arith.constant dense<0.000000e+00> : vector<32x32xf32>
    %88 = tpu.matmul %87, %86, %cst_56 {dimension_numbers = #tpu.dot_dimension_numbers<[1], [0], [0], [1], [0, 0, 1, 1], [], []>} : vector<32x32xbf16>, vector<32x32xbf16>, vector<32x32xf32> -> vector<32x32xf32>
    %c2_57 = arith.constant 2 : index
    %c0_58 = arith.constant 0 : index
    %c0_59 = arith.constant 0 : index
    %89 = vector.load %arg6[%c2_57, %c0_58, %c0_59] : memref<4x1x32xf32, #tpu.memory_space<vmem>>, vector<1x1x32xf32>
    %90 = vector.shape_cast %89 : vector<1x1x32xf32> to vector<1x32xf32>
    %91 = vector.broadcast %90 : vector<1x32xf32> to vector<32x32xf32>
    %92 = arith.addf %88, %91 : vector<32x32xf32>
    %cst_60 = arith.constant 0.000000e+00 : f32
    %93 = vector.broadcast %cst_60 : f32 to vector<32x32xf32>
    %94 = arith.maximumf %92, %93 : vector<32x32xf32>
    %95 = arith.addf %81, %94 : vector<32x32xf32>
    %96 = vector.broadcast %9 : vector<4x1xi32> to vector<4x32xi32>
    %97 = vector.broadcast %18 : vector<1x32xi32> to vector<4x32xi32>
    %98 = arith.cmpi eq, %96, %97 : vector<4x32xi32>
    %99 = arith.extui %98 : vector<4x32xi1> to vector<4x32xi32>
    %100 = arith.sitofp %99 : vector<4x32xi32> to vector<4x32xf32>
    %101 = arith.truncf %100 : vector<4x32xf32> to vector<4x32xbf16>
    %102 = vector.broadcast %12 : vector<4x1xi32> to vector<4x32xi32>
    %103 = vector.broadcast %18 : vector<1x32xi32> to vector<4x32xi32>
    %104 = arith.cmpi eq, %102, %103 : vector<4x32xi32>
    %105 = arith.extui %104 : vector<4x32xi1> to vector<4x32xi32>
    %106 = arith.sitofp %105 : vector<4x32xi32> to vector<4x32xf32>
    %107 = arith.truncf %106 : vector<4x32xf32> to vector<4x32xbf16>
    %108 = arith.truncf %95 : vector<32x32xf32> to vector<32x32xbf16>
    %cst_61 = arith.constant dense<0.000000e+00> : vector<4x32xf32>
    %109 = tpu.matmul %101, %108, %cst_61 {dimension_numbers = #tpu.dot_dimension_numbers<[1], [0], [0], [1], [0, 0, 1, 1], [], []>} : vector<4x32xbf16>, vector<32x32xbf16>, vector<4x32xf32> -> vector<4x32xf32>
    %110 = arith.truncf %95 : vector<32x32xf32> to vector<32x32xbf16>
    %cst_62 = arith.constant dense<0.000000e+00> : vector<4x32xf32>
    %111 = tpu.matmul %107, %110, %cst_62 {dimension_numbers = #tpu.dot_dimension_numbers<[1], [0], [0], [1], [0, 0, 1, 1], [], []>} : vector<4x32xbf16>, vector<32x32xbf16>, vector<4x32xf32> -> vector<4x32xf32>
    %112 = arith.truncf %109 : vector<4x32xf32> to vector<4x32xbf16>
    %cst_63 = arith.constant dense<0.000000e+00> : vector<4x32xf32>
    %113 = tpu.matmul %112, %26, %cst_63 {dimension_numbers = #tpu.dot_dimension_numbers<[1], [0], [0], [1], [0, 0, 1, 1], [], []>} : vector<4x32xbf16>, vector<32x32xbf16>, vector<4x32xf32> -> vector<4x32xf32>
    %114 = arith.truncf %111 : vector<4x32xf32> to vector<4x32xbf16>
    %cst_64 = arith.constant dense<0.000000e+00> : vector<4x32xf32>
    %115 = tpu.matmul %114, %28, %cst_64 {dimension_numbers = #tpu.dot_dimension_numbers<[1], [0], [0], [1], [0, 0, 1, 1], [], []>} : vector<4x32xbf16>, vector<32x32xbf16>, vector<4x32xf32> -> vector<4x32xf32>
    %116 = arith.subf %113, %115 : vector<4x32xf32>
    %117 = vector.broadcast %32 : vector<1x32xf32> to vector<4x32xf32>
    %118 = arith.addf %116, %117 : vector<4x32xf32>
    %119 = arith.mulf %118, %118 : vector<4x32xf32>
    %cst_65 = arith.constant dense<0.000000e+00> : vector<4xf32>
    %120 = vector.multi_reduction <add>, %119, %cst_65 [1] : vector<4x32xf32> to vector<4xf32>
    %121 = vector.shape_cast %120 : vector<4xf32> to vector<4x1xf32>
    %122 = math.sqrt %121 : vector<4x1xf32>
    %123 = tpu.iota {dimensions = array<i32: 0>} : vector<4x128xi32>
    %124 = tpu.iota {dimensions = array<i32: 1>} : vector<4x128xi32>
    %125 = arith.cmpi eq, %123, %124 : vector<4x128xi32>
    %c2_i32 = arith.constant 2 : i32
    %126 = vector.broadcast %c2_i32 : i32 to vector<4x128xi32>
    %127 = arith.addi %124, %126 : vector<4x128xi32>
    %128 = arith.cmpi eq, %123, %127 : vector<4x128xi32>
    %129 = arith.ori %125, %128 : vector<4x128xi1>
    %c2_i32_66 = arith.constant 2 : i32
    %130 = vector.broadcast %c2_i32_66 : i32 to vector<4x128xi32>
    %131 = arith.cmpi slt, %124, %130 : vector<4x128xi32>
    %132 = arith.andi %129, %131 : vector<4x128xi1>
    %133 = arith.extui %132 : vector<4x128xi1> to vector<4x128xi32>
    %134 = arith.sitofp %133 : vector<4x128xi32> to vector<4x128xf32>
    %135 = vector.broadcast %122 : vector<4x1xf32> to vector<4x128xf32>
    %136 = arith.mulf %135, %134 : vector<4x128xf32>
    %cst_67 = arith.constant dense<0.000000e+00> : vector<128xf32>
    %137 = vector.multi_reduction <add>, %136, %cst_67 [0] : vector<4x128xf32> to vector<128xf32>
    %138 = vector.shape_cast %137 : vector<128xf32> to vector<1x128xf32>
    %c0_68 = arith.constant 0 : index
    %c0_69 = arith.constant 0 : index
    %139 = vector.load %arg7[%c0_68, %c0_69] : memref<1x128xf32, #tpu.memory_space<vmem>>, vector<1x128xf32>
    tpu.vector_store %arg7[%c0_68, %c0_69], %138 {strides = array<i32>} : memref<1x128xf32, #tpu.memory_space<vmem>>, vector<1x128xf32>,
    return
  }
}

</mosaic_0001>

<llo_original>
// kernel: ddi_forward.1
$region0: #{ddi_forward.1}
  #allocation0 [shape = 'u32[]', space=smem, size = 0x4, offset = 0x4, fixed_abs, tag = 'smem constant byte address 0x4 - core index']
  #allocation1 [shape = 'u32[144,128]{1,0:T(1,128)}', space=vmem, size = 0x12000, scoped, tag = 'internal scratch']
  %s0 = inlined_call_operand.vmem [shape: s32[5,48,1], index: 0, kind: input, shape index: {}]
  %s1 = inlined_call_operand.vmem [shape: s32[2,1,128], index: 1, kind: input, shape index: {}]
  %s2 = inlined_call_operand.vmem [shape: bf16[32,16], index: 2, kind: input, shape index: {}]
  %s3 = inlined_call_operand.vmem [shape: bf16[3,16,32], index: 3, kind: input, shape index: {}]
  %s4 = inlined_call_operand.vmem [shape: bf16[2,32,32], index: 4, kind: input, shape index: {}]
  %s5 = inlined_call_operand.vmem [shape: bf16[2,32,32], index: 5, kind: input, shape index: {}]
  %s6 = inlined_call_operand.vmem [shape: f32[4,1,32], index: 6, kind: input, shape index: {}]
  %s7 = inlined_call_operand.vmem [shape: f32[1,128], index: 7, kind: output, shape index: {}]
  %s8 = sld [smem:[#allocation0]]
  $region38: #{ddi_forward.1} parent=0
    _
  %s10 = ssub.s32 1, %s8
  %s11 = scalar_select 0, %s10, %s8
  // Predicated region
  $region2: #{ddi_forward.1} parent=0 // pred_check
    _
  $region3: #{ddi_forward.1} parent=0 // pred_check_branch
    %13 = sbr.rel (0) target = $region5
  $region4: #{ddi_forward.1} parent=0 // pred_region
    _
  $region5: #{ddi_forward.1} parent=0 // pred_fallthru
    _
  // Predicated region
  $region6: #{ddi_forward.1} parent=0 // pred_check
    _
  $region7: #{ddi_forward.1} parent=0 // pred_check_branch
    %15 = sbr.rel (0) target = $region9
  $region8: #{ddi_forward.1} parent=0 // pred_region
    _
  $region9: #{ddi_forward.1} parent=0 // pred_fallthru
    _
  // Predicated region
  $region10: #{ddi_forward.1} parent=0 // pred_check
    _
  $region11: #{ddi_forward.1} parent=0 // pred_check_branch
    %17 = sbr.rel (0) target = $region13
  $region12: #{ddi_forward.1} parent=0 // pred_region
    _
  $region13: #{ddi_forward.1} parent=0 // pred_fallthru
    _
  // Predicated region
  $region14: #{ddi_forward.1} parent=0 // pred_check
    _
  $region15: #{ddi_forward.1} parent=0 // pred_check_branch
    %19 = sbr.rel (0) target = $region17
  $region16: #{ddi_forward.1} parent=0 // pred_region
    _
  $region17: #{ddi_forward.1} parent=0 // pred_fallthru
    _
  // Predicated region
  $region18: #{ddi_forward.1} parent=0 // pred_check
    _
  $region19: #{ddi_forward.1} parent=0 // pred_check_branch
    %21 = sbr.rel (0) target = $region21
  $region20: #{ddi_forward.1} parent=0 // pred_region
    _
  $region21: #{ddi_forward.1} parent=0 // pred_fallthru
    _
  // Predicated region
  $region22: #{ddi_forward.1} parent=0 // pred_check
    _
  $region23: #{ddi_forward.1} parent=0 // pred_check_branch
    %23 = sbr.rel (0) target = $region25
  $region24: #{ddi_forward.1} parent=0 // pred_region
    _
  $region25: #{ddi_forward.1} parent=0 // pred_fallthru
    _
  // Predicated region
  $region26: #{ddi_forward.1} parent=0 // pred_check
    _
  $region27: #{ddi_forward.1} parent=0 // pred_check_branch
    %25 = sbr.rel (0) target = $region29
  $region28: #{ddi_forward.1} parent=0 // pred_region
    _
  $region29: #{ddi_forward.1} parent=0 // pred_fallthru
    _
  %v27 = vld [vmem:[%s0] sm:$0xff]
  %v28 = vld [vmem:[%s0 + $0x8] sm:$0xff]
  %v29 = vld [vmem:[%s0 + $0x10] sm:$0xff]
  %v30 = vld [vmem:[%s0 + $0x18] sm:$0xff]
  %s31 = scalar_lea.vmem %s0, 48
  %v32 = vld [vmem:[%s31] sm:$0xff]
  %v33 = vld [vmem:[%s31 + $0x8] sm:$0xff]
  %v34 = vld [vmem:[%s31 + $0x10] sm:$0xff]
  %v35 = vld [vmem:[%s31 + $0x18] sm:$0xff]
  %v36 = vld [vmem:[%s31 + $0x20] sm:$0xff]
  %v37 = vld [vmem:[%s31 + $0x28] sm:$0xff]
  %s38 = scalar_lea.vmem %s0, 96
  %v39 = vld [vmem:[%s38] sm:$0xff]
  %v40 = vld [vmem:[%s38 + $0x8] sm:$0xff]
  %v41 = vld [vmem:[%s38 + $0x10] sm:$0xff]
  %v42 = vld [vmem:[%s38 + $0x18] sm:$0xff]
  %v43 = vld [vmem:[%s38 + $0x20] sm:$0xff]
  %v44 = vld [vmem:[%s38 + $0x28] sm:$0xff]
  %s45 = scalar_lea.vmem %s0, 144
  %v46 = vld [vmem:[%s45] sm:$0xff]
  %s47 = scalar_lea.vmem %s0, 192
  %v48 = vld [vmem:[%s47] sm:$0xff]
  %v49 = vld [vmem:[%s1] sm:$0x1]
  %s50 = scalar_lea.vmem %s1, 1
  %v51 = vld [vmem:[%s50] sm:$0x1]
  %v52 = vld [vmem:[%s3] sm:$0xf]
  %v53 = vld [vmem:[%s3 + $0x4] sm:$0xf]
  %s54 = scalar_lea.vmem %s3, 8
  %v55 = vld [vmem:[%s54] sm:$0xf]
  %v56 = vld [vmem:[%s54 + $0x4] sm:$0xf]
  %s57 = scalar_lea.vmem %s3, 16
  %v58 = vld [vmem:[%s57] sm:$0xf]
  %v59 = vld [vmem:[%s57 + $0x4] sm:$0xf]
  %v60 = vld [vmem:[%s5] sm:$0xf]
  %v61 = vld [vmem:[%s5 + $0x4] sm:$0xf]
  %v62 = vld [vmem:[%s5 + $0x8] sm:$0xf]
  %v63 = vld [vmem:[%s5 + $0xc] sm:$0xf]
  %s64 = scalar_lea.vmem %s5, 16
  %v65 = vld [vmem:[%s64] sm:$0xf]
  %v66 = vld [vmem:[%s64 + $0x4] sm:$0xf]
  %v67 = vld [vmem:[%s64 + $0x8] sm:$0xf]
  %v68 = vld [vmem:[%s64 + $0xc] sm:$0xf]
  %v69 = vld [vmem:[%s6] sm:$0x1]
  %s70 = scalar_lea.vmem %s6, 3
  %v71 = vld [vmem:[%s70] sm:$0x1]
  %v72 = vlaneseq
  %v73 = vand.u32 %v72, 127
  %74 = vset.pattern.permute.xlu0 0
  %75 = vperm.xlu0 %74, %v27
  %v76 = vpop.permute.xlu0 %75
  %77 = vset.pattern.permute.xlu0 0
  %78 = vperm.xlu0 %77, %v28
  %v79 = vpop.permute.xlu0 %78
  %80 = vset.pattern.permute.xlu0 0
  %81 = vperm.xlu0 %80, %v29
  %v82 = vpop.permute.xlu0 %81
  %83 = vset.pattern.permute.xlu0 0
  %84 = vperm.xlu0 %83, %v30
  %v85 = vpop.permute.xlu0 %84
  %vm86 = vcmp.eq.s32.totalorder %v76, %v73
  %vm87 = vcmp.eq.s32.totalorder %v79, %v73
  %vm88 = vcmp.eq.s32.totalorder %v82, %v73
  %vm89 = vcmp.eq.s32.totalorder %v85, %v73
  %v90 = vsel %vm86, 1, 0
  %v91 = vsel %vm87, 1, 0
  %v92 = vsel %vm88, 1, 0
  %v93 = vsel %vm89, 1, 0
  %v94 = vcvt.s32.f32 %v90
  %v95 = vcvt.s32.f32 %v91
  %v96 = vcvt.s32.f32 %v92
  %v97 = vcvt.s32.f32 %v93
  %v98 = vpack.c.bf16 %v95, %v94
  %v99 = vpack.c.bf16 %v97, %v96
  %v100 = vld [vmem:[%s2] sm:$0xf]
  %v101 = vld [vmem:[%s2 + $0x4] sm:$0xf]
  %v102 = vld [vmem:[%s2 + $0x8] sm:$0xf]
  %v103 = vld [vmem:[%s2 + $0xc] sm:$0xf]
  %v108 = vunpack.c.l.b16 %v100
  %v109 = vunpack.c.l.b16 %v101
  %v110 = vunpack.c.l.b16 %v102
  %v111 = vunpack.c.l.b16 %v103
  %v112 = vpack.c.b16 %v109, %v108
  %v113 = vpack.c.b16 %v111, %v110
  %v116 = vunpack.c.l.b16 %v55
  %v117 = vunpack.c.l.b16 %v56
  %v118 = vpack.c.b16 %v117, %v116
  %vm120 = vcmask 130048
  %v122 = vsel %vm120, %v112, 0
  %v125 = vsel %vm120, %v113, 0
  %127 = vmatprep.subr.bf16.mxu0 0
  %128 = vmatpush1.bf16.msra.mxu0 0
  %129 = vmatprep.subr.bf16.mxu0 0
  %130 = vmatpush1.bf16.msra.mxu0 0
  %131 = vmatprep.subr.bf16.mxu0 0
  %132 = vmatpush1.bf16.msra.mxu0 0
  %133 = vmatprep.subr.bf16.mxu0 0
  %134 = vmatpush1.bf16.msra.mxu0 0
  %135 = vmatprep.subr.bf16.mxu0 0
  %136 = vmatpush1.bf16.msra.mxu0 0
  %137 = vmatprep.subr.bf16.mxu0 0
  %138 = vmatpush1.bf16.msra.mxu0 0
  %139 = vmatprep.subr.bf16.mxu0 0
  %140 = vmatpush1.bf16.msra.mxu0 0
  %141 = vmatprep.subr.bf16.mxu0 0
  %142 = vmatpush1.bf16.msra.mxu0 %v118
  %143 = vmatprep.subr.bf16.mxu0 0
  %144 = vmatpush2.bf16.msra.mxu0 0
  %145 = vmatprep.subr.bf16.mxu0 0
  %146 = vmatpush2.bf16.msra.mxu0 0
  %147 = vmatprep.subr.bf16.mxu0 0
  %148 = vmatpush2.bf16.msra.mxu0 0
  %149 = vmatprep.subr.bf16.mxu0 0
  %150 = vmatpush2.bf16.msra.mxu0 0
  %151 = vmatprep.subr.bf16.mxu0 0
  %152 = vmatpush2.bf16.msra.mxu0 0
  %153 = vmatprep.subr.bf16.mxu0 0
  %154 = vmatpush2.bf16.msra.mxu0 0
  %155 = vmatprep.subr.bf16.mxu0 0
  %156 = vmatpush2.bf16.msra.mxu0 0
  %157 = vmatprep.subr.bf16.mxu0 0
  %158 = vmatpush2.bf16.msra.mxu0 0
  %159 = vmatprep.mubr.bf16.mxu0 0
  %160 = vmatmul.mubr.bf16.gmra.mxu0 %v122
  %v161 = vpop.f32.mrf.mxu0
  %v162 = vadd.f32 0.0, %v161
  %v163 = vpop.f32.mrf.mxu0
  %v164 = vpop.f32.mrf.mxu0
  %v165 = vadd.f32 0.0, %v164
  %v166 = vpop.f32.mrf.mxu0
  %167 = vmatprep.mubr.bf16.mxu0 0
  %168 = vmatmul.mubr.bf16.gmra.mxu0 %v125
  %v169 = vpop.f32.mrf.mxu0
  %v170 = vadd.f32 0.0, %v169
  %v171 = vpop.f32.mrf.mxu0
  %v172 = vpop.f32.mrf.mxu0
  %v173 = vadd.f32 0.0, %v172
  %v174 = vpop.f32.mrf.mxu0
  %175 = vdwg.mxu0
  %v178 = vunpack.c.l.b16 %v52
  %v179 = vunpack.c.l.b16 %v53
  %v180 = vpack.c.b16 %v179, %v178
  %v183 = vsel %vm120, %v98, 0
  %v186 = vsel %vm120, %v99, 0
  %188 = vmatprep.subr.bf16.mxu0 0
  %189 = vmatpush1.bf16.msra.mxu0 0
  %190 = vmatprep.subr.bf16.mxu0 0
  %191 = vmatpush1.bf16.msra.mxu0 0
  %192 = vmatprep.subr.bf16.mxu0 0
  %193 = vmatpush1.bf16.msra.mxu0 0
  %194 = vmatprep.subr.bf16.mxu0 0
  %195 = vmatpush1.bf16.msra.mxu0 0
  %196 = vmatprep.subr.bf16.mxu0 0
  %197 = vmatpush1.bf16.msra.mxu0 0
  %198 = vmatprep.subr.bf16.mxu0 0
  %199 = vmatpush1.bf16.msra.mxu0 0
  %200 = vmatprep.subr.bf16.mxu0 0
  %201 = vmatpush1.bf16.msra.mxu0 0
  %202 = vmatprep.subr.bf16.mxu0 0
  %203 = vmatpush1.bf16.msra.mxu0 %v180
  %204 = vmatprep.subr.bf16.mxu0 0
  %205 = vmatpush2.bf16.msra.mxu0 0
  %206 = vmatprep.subr.bf16.mxu0 0
  %207 = vmatpush2.bf16.msra.mxu0 0
  %208 = vmatprep.subr.bf16.mxu0 0
  %209 = vmatpush2.bf16.msra.mxu0 0
  %210 = vmatprep.subr.bf16.mxu0 0
  %211 = vmatpush2.bf16.msra.mxu0 0
  %212 = vmatprep.subr.bf16.mxu0 0
  %213 = vmatpush2.bf16.msra.mxu0 0
  %214 = vmatprep.subr.bf16.mxu0 0
  %215 = vmatpush2.bf16.msra.mxu0 0
  %216 = vmatprep.subr.bf16.mxu0 0
  %217 = vmatpush2.bf16.msra.mxu0 0
  %218 = vmatprep.subr.bf16.mxu0 0
  %219 = vmatpush2.bf16.msra.mxu0 0
  %220 = vmatprep.mubr.bf16.mxu0 0
  %221 = vmatmul.mubr.bf16.gmra.mxu0 %v183
  %v222 = vpop.f32.mrf.mxu0
  %v223 = vadd.f32 %v162, %v222
  %v224 = vpop.f32.mrf.mxu0
  %v225 = vpop.f32.mrf.mxu0
  %v226 = vadd.f32 %v165, %v225
  %v227 = vpop.f32.mrf.mxu0
  %228 = vmatprep.mubr.bf16.mxu0 0
  %229 = vmatmul.mubr.bf16.gmra.mxu0 %v186
  %v230 = vpop.f32.mrf.mxu0
  %v231 = vadd.f32 %v170, %v230
  %v232 = vpop.f32.mrf.mxu0
  %v233 = vpop.f32.mrf.mxu0
  %v234 = vadd.f32 %v173, %v233
  %v235 = vpop.f32.mrf.mxu0
  %236 = vdwg.mxu0
  %v238 = vlaneseq
  %v239 = vshrl.u32 %v238, 7
  %v240 = vsub.s32 0, %v239
  %v241 = vrot.slane %v69, %v240
  %v243 = vadd.f32 %v223, %v241
  %v244 = vadd.f32 %v226, %v241
  %v245 = vadd.f32 %v231, %v241
  %v246 = vadd.f32 %v234, %v241
  %247 = vset.pattern.permute.xlu0 0
  %248 = vperm.xlu0 %247, %v32
  %v249 = vpop.permute.xlu0 %248
  %250 = vset.pattern.permute.xlu0 0
  %251 = vperm.xlu0 %250, %v33
  %v252 = vpop.permute.xlu0 %251
  %253 = vset.pattern.permute.xlu0 0
  %254 = vperm.xlu0 %253, %v34
  %v255 = vpop.permute.xlu0 %254
  %256 = vset.pattern.permute.xlu0 0
  %257 = vperm.xlu0 %256, %v35
  %v258 = vpop.permute.xlu0 %257
  %259 = vset.pattern.permute.xlu0 0
  %260 = vperm.xlu0 %259, %v36
  %v261 = vpop.permute.xlu0 %260
  %262 = vset.pattern.permute.xlu0 0
  %263 = vperm.xlu0 %262, %v37
  %v264 = vpop.permute.xlu0 %263
  %vm265 = vcmp.eq.s32.totalorder %v249, %v73
  %vm266 = vcmp.eq.s32.totalorder %v252, %v73
  %vm267 = vcmp.eq.s32.totalorder %v255, %v73
  %vm268 = vcmp.eq.s32.totalorder %v258, %v73
  %vm269 = vcmp.eq.s32.totalorder %v261, %v73
  %vm270 = vcmp.eq.s32.totalorder %v264, %v73
  %v271 = vsel %vm265, 1, 0
  %v272 = vsel %vm266, 1, 0
  %v273 = vsel %vm267, 1, 0
  %v274 = vsel %vm268, 1, 0
  %v275 = vsel %vm269, 1, 0
  %v276 = vsel %vm270, 1, 0
  %v277 = vcvt.s32.f32 %v271
  %v278 = vcvt.s32.f32 %v272
  %v279 = vcvt.s32.f32 %v273
  %v280 = vcvt.s32.f32 %v274
  %v281 = vcvt.s32.f32 %v275
  %v282 = vcvt.s32.f32 %v276
  %v283 = vpack.c.bf16 %v278, %v277
  %v284 = vpack.c.bf16 %v280, %v279
  %v285 = vpack.c.bf16 %v282, %v281
  %v288 = vunpack.c.l.b16 %v58
  %v289 = vunpack.c.l.b16 %v59
  %v290 = vpack.c.b16 %v289, %v288
  %v293 = vsel %vm120, %v283, 0
  %v296 = vsel %vm120, %v284, 0
  %v299 = vsel %vm120, %v285, 0
  %301 = vmatprep.subr.bf16.mxu0 0
  %302 = vmatpush1.bf16.msra.mxu0 0
  %303 = vmatprep.subr.bf16.mxu0 0
  %304 = vmatpush1.bf16.msra.mxu0 0
  %305 = vmatprep.subr.bf16.mxu0 0
  %306 = vmatpush1.bf16.msra.mxu0 0
  %307 = vmatprep.subr.bf16.mxu0 0
  %308 = vmatpush1.bf16.msra.mxu0 0
  %309 = vmatprep.subr.bf16.mxu0 0
  %310 = vmatpush1.bf16.msra.mxu0 0
  %311 = vmatprep.subr.bf16.mxu0 0
  %312 = vmatpush1.bf16.msra.mxu0 0
  %313 = vmatprep.subr.bf16.mxu0 0
  %314 = vmatpush1.bf16.msra.mxu0 0
  %315 = vmatprep.subr.bf16.mxu0 0
  %316 = vmatpush1.bf16.msra.mxu0 %v290
  %317 = vmatprep.subr.bf16.mxu0 0
  %318 = vmatpush2.bf16.msra.mxu0 0
  %319 = vmatprep.subr.bf16.mxu0 0
  %320 = vmatpush2.bf16.msra.mxu0 0
  %321 = vmatprep.subr.bf16.mxu0 0
  %322 = vmatpush2.bf16.msra.mxu0 0
  %323 = vmatprep.subr.bf16.mxu0 0
  %324 = vmatpush2.bf16.msra.mxu0 0
  %325 = vmatprep.subr.bf16.mxu0 0
  %326 = vmatpush2.bf16.msra.mxu0 0
  %327 = vmatprep.subr.bf16.mxu0 0
  %328 = vmatpush2.bf16.msra.mxu0 0
  %329 = vmatprep.subr.bf16.mxu0 0
  %330 = vmatpush2.bf16.msra.mxu0 0
  %331 = vmatprep.subr.bf16.mxu0 0
  %332 = vmatpush2.bf16.msra.mxu0 0
  %333 = vmatprep.mubr.bf16.mxu0 0
  %334 = vmatmul.mubr.bf16.gmra.mxu0 %v293
  %v335 = vpop.f32.mrf.mxu0
  %v336 = vadd.f32 0.0, %v335
  %v337 = vpop.f32.mrf.mxu0
  %v338 = vpop.f32.mrf.mxu0
  %v339 = vadd.f32 0.0, %v338
  %v340 = vpop.f32.mrf.mxu0
  %341 = vmatprep.mubr.bf16.mxu0 0
  %342 = vmatmul.mubr.bf16.gmra.mxu0 %v296
  %v343 = vpop.f32.mrf.mxu0
  %v344 = vadd.f32 0.0, %v343
  %v345 = vpop.f32.mrf.mxu0
  %v346 = vpop.f32.mrf.mxu0
  %v347 = vadd.f32 0.0, %v346
  %v348 = vpop.f32.mrf.mxu0
  %349 = vmatprep.mubr.bf16.mxu0 0
  %350 = vmatmul.mubr.bf16.gmra.mxu0 %v299
  %v351 = vpop.f32.mrf.mxu0
  %v352 = vadd.f32 0.0, %v351
  %v353 = vpop.f32.mrf.mxu0
  %v354 = vpop.f32.mrf.mxu0
  %v355 = vadd.f32 0.0, %v354
  %v356 = vpop.f32.mrf.mxu0
  %357 = vdwg.mxu0
  %358 = vset.pattern.permute.xlu0 0
  %359 = vperm.xlu0 %358, %v39
  %v360 = vpop.permute.xlu0 %359
  %361 = vset.pattern.permute.xlu0 0
  %362 = vperm.xlu0 %361, %v40
  %v363 = vpop.permute.xlu0 %362
  %364 = vset.pattern.permute.xlu0 0
  %365 = vperm.xlu0 %364, %v41
  %v366 = vpop.permute.xlu0 %365
  %367 = vset.pattern.permute.xlu0 0
  %368 = vperm.xlu0 %367, %v42
  %v369 = vpop.permute.xlu0 %368
  %370 = vset.pattern.permute.xlu0 0
  %371 = vperm.xlu0 %370, %v43
  %v372 = vpop.permute.xlu0 %371
  %373 = vset.pattern.permute.xlu0 0
  %374 = vperm.xlu0 %373, %v44
  %v375 = vpop.permute.xlu0 %374
  %vm376 = vcmp.eq.s32.totalorder %v360, %v73
  %vm377 = vcmp.eq.s32.totalorder %v363, %v73
  %vm378 = vcmp.eq.s32.totalorder %v366, %v73
  %vm379 = vcmp.eq.s32.totalorder %v369, %v73
  %vm380 = vcmp.eq.s32.totalorder %v372, %v73
  %vm381 = vcmp.eq.s32.totalorder %v375, %v73
  %v382 = vsel %vm376, 1, 0
  %v383 = vsel %vm377, 1, 0
  %v384 = vsel %vm378, 1, 0
  %v385 = vsel %vm379, 1, 0
  %v386 = vsel %vm380, 1, 0
  %v387 = vsel %vm381, 1, 0
  %v388 = vcvt.s32.f32 %v382
  %v389 = vcvt.s32.f32 %v383
  %v390 = vcvt.s32.f32 %v384
  %v391 = vcvt.s32.f32 %v385
  %v392 = vcvt.s32.f32 %v386
  %v393 = vcvt.s32.f32 %v387
  %v394 = vpack.c.bf16 %v389, %v388
  %v395 = vpack.c.bf16 %v391, %v390
  %v396 = vpack.c.bf16 %v393, %v392
  %v397 = vlaneseq
  %v398 = vshrl.u32 %v397, 7
  %v399 = vadd.s32 %v398, 8
  %v400 = vadd.s32 %v398, 16
  %v401 = vadd.s32 %v398, 24
  %v402 = vlaneseq
  %v403 = vshrl.u32 %v402, 7
  %v404 = vsub.s32 0, %v403
  %v405 = vrot.slane %v49, %v404
  %vm406 = vcmp.eq.s32.totalorder %v405, %v398
  %vm407 = vcmp.eq.s32.totalorder %v405, %v399
  %vm408 = vcmp.eq.s32.totalorder %v405, %v400
  %vm409 = vcmp.eq.s32.totalorder %v405, %v401
  %v410 = vsel %vm406, 1, 0
  %v411 = vsel %vm407, 1, 0
  %v412 = vsel %vm408, 1, 0
  %v413 = vsel %vm409, 1, 0
  %v414 = vcvt.s32.f32 %v410
  %v415 = vcvt.s32.f32 %v411
  %v416 = vcvt.s32.f32 %v412
  %v417 = vcvt.s32.f32 %v413
  %v418 = vpack.c.bf16 %v415, %v414
  %v419 = vpack.c.bf16 %v417, %v416
  %vm420 = vcmask 392192
  %v422 = vsel %vm420, %v418, 0
  %v425 = vsel %vm420, %v419, 0
  %427 = vmatprep.subr.bf16.mxu0 0
  %428 = vmatpush1.bf16.msra.mxu0 0
  %429 = vmatprep.subr.bf16.mxu0 0
  %430 = vmatpush1.bf16.msra.mxu0 0
  %431 = vmatprep.subr.bf16.mxu0 0
  %432 = vmatpush1.bf16.msra.mxu0 0
  %433 = vmatprep.subr.bf16.mxu0 0
  %434 = vmatpush1.bf16.msra.mxu0 0
  %435 = vmatprep.subr.bf16.mxu0 0
  %436 = vmatpush1.bf16.msra.mxu0 0
  %437 = vmatprep.subr.bf16.mxu0 0
  %438 = vmatpush1.bf16.msra.mxu0 %v396
  %439 = vmatprep.subr.bf16.mxu0 0
  %440 = vmatpush1.bf16.msra.mxu0 %v395
  %441 = vmatprep.subr.bf16.mxu0 0
  %442 = vmatpush1.bf16.msra.mxu0 %v394
  %443 = vmatprep.subr.bf16.mxu0 0
  %444 = vmatpush2.bf16.msra.mxu0 0
  %445 = vmatprep.subr.bf16.mxu0 0
  %446 = vmatpush2.bf16.msra.mxu0 0
  %447 = vmatprep.subr.bf16.mxu0 0
  %448 = vmatpush2.bf16.msra.mxu0 0
  %449 = vmatprep.subr.bf16.mxu0 0
  %450 = vmatpush2.bf16.msra.mxu0 0
  %451 = vmatprep.subr.bf16.mxu0 0
  %452 = vmatpush2.bf16.msra.mxu0 0
  %453 = vmatprep.subr.bf16.mxu0 0
  %454 = vmatpush2.bf16.msra.mxu0 0
  %455 = vmatprep.subr.bf16.mxu0 0
  %456 = vmatpush2.bf16.msra.mxu0 0
  %457 = vmatprep.subr.bf16.mxu0 0
  %458 = vmatpush2.bf16.msra.mxu0 0
  %459 = vmatprep.mubr.bf16.mxu0 0
  %460 = vmatmul.mubr.bf16.gmra.mxu0 %v422
  %v461 = vpop.f32.mrf.mxu0
  %v462 = vadd.f32 0.0, %v461
  %v463 = vpop.f32.mrf.mxu0
  %v464 = vpop.f32.mrf.mxu0
  %v465 = vadd.f32 0.0, %v464
  %v466 = vpop.f32.mrf.mxu0
  %467 = vmatprep.mubr.bf16.mxu0 0
  %468 = vmatmul.mubr.bf16.gmra.mxu0 %v425
  %v469 = vpop.f32.mrf.mxu0
  %v470 = vadd.f32 0.0, %v469
  %v471 = vpop.f32.mrf.mxu0
  %v472 = vpop.f32.mrf.mxu0
  %v473 = vadd.f32 0.0, %v472
  %v474 = vpop.f32.mrf.mxu0
  %475 = vdwg.mxu0
  %v476 = vpack.c.bf16 %v465, %v462
  %v477 = vpack.c.bf16 %v473, %v470
  %v478 = vpack.c.bf16 %v339, %v336
  %v479 = vpack.c.bf16 %v347, %v344
  %v480 = vpack.c.bf16 %v355, %v352
  %481 = vmatprep.subr.bf16.mxu0 0
  %482 = vmatpush1.bf16.msra.mxu0 0
  %483 = vmatprep.subr.bf16.mxu0 0
  %484 = vmatpush1.bf16.msra.mxu0 0
  %485 = vmatprep.subr.bf16.mxu0 0
  %486 = vmatpush1.bf16.msra.mxu0 0
  %487 = vmatprep.subr.bf16.mxu0 0
  %488 = vmatpush1.bf16.msra.mxu0 0
  %489 = vmatprep.subr.bf16.mxu0 0
  %490 = vmatpush1.bf16.msra.mxu0 0
  %491 = vmatprep.subr.bf16.mxu0 0
  %492 = vmatpush1.bf16.msra.mxu0 %v480
  %493 = vmatprep.subr.bf16.mxu0 0
  %494 = vmatpush1.bf16.msra.mxu0 %v479
  %495 = vmatprep.subr.bf16.mxu0 0
  %496 = vmatpush1.bf16.msra.mxu0 %v478
  %497 = vmatprep.subr.bf16.mxu0 0
  %498 = vmatpush2.bf16.msra.mxu0 0
  %499 = vmatprep.subr.bf16.mxu0 0
  %500 = vmatpush2.bf16.msra.mxu0 0
  %501 = vmatprep.subr.bf16.mxu0 0
  %502 = vmatpush2.bf16.msra.mxu0 0
  %503 = vmatprep.subr.bf16.mxu0 0
  %504 = vmatpush2.bf16.msra.mxu0 0
  %505 = vmatprep.subr.bf16.mxu0 0
  %506 = vmatpush2.bf16.msra.mxu0 0
  %507 = vmatprep.subr.bf16.mxu0 0
  %508 = vmatpush2.bf16.msra.mxu0 0
  %509 = vmatprep.subr.bf16.mxu0 0
  %510 = vmatpush2.bf16.msra.mxu0 0
  %511 = vmatprep.subr.bf16.mxu0 0
  %512 = vmatpush2.bf16.msra.mxu0 0
  %513 = vmatprep.mubr.bf16.mxu0 0
  %514 = vmatmul.mubr.bf16.gmra.mxu0 %v422
  %v515 = vpop.f32.mrf.mxu0
  %v516 = vadd.f32 0.0, %v515
  %v517 = vpop.f32.mrf.mxu0
  %v518 = vpop.f32.mrf.mxu0
  %v519 = vadd.f32 0.0, %v518
  %v520 = vpop.f32.mrf.mxu0
  %521 = vmatprep.mubr.bf16.mxu0 0
  %522 = vmatmul.mubr.bf16.gmra.mxu0 %v425
  %v523 = vpop.f32.mrf.mxu0
  %v524 = vadd.f32 0.0, %v523
  %v525 = vpop.f32.mrf.mxu0
  %v526 = vpop.f32.mrf.mxu0
  %v527 = vadd.f32 0.0, %v526
  %v528 = vpop.f32.mrf.mxu0
  %529 = vdwg.mxu0
  %v530 = vpack.c.bf16 %v244, %v243
  %v531 = vpack.c.bf16 %v246, %v245
  %vm532 = vcmask 261120
  %v534 = vsel %vm532, %v476, 0
  %v537 = vsel %vm532, %v477, 0
  %539 = vmatprep.subr.bf16.mxu0 0
  %540 = vmatpush1.bf16.msra.mxu0 0
  %541 = vmatprep.subr.bf16.mxu0 0
  %542 = vmatpush1.bf16.msra.mxu0 0
  %543 = vmatprep.subr.bf16.mxu0 0
  %544 = vmatpush1.bf16.msra.mxu0 0
  %545 = vmatprep.subr.bf16.mxu0 0
  %546 = vmatpush1.bf16.msra.mxu0 0
  %547 = vmatprep.subr.bf16.mxu0 0
  %548 = vmatpush1.bf16.msra.mxu0 0
  %549 = vmatprep.subr.bf16.mxu0 0
  %550 = vmatpush1.bf16.msra.mxu0 0
  %551 = vmatprep.subr.bf16.mxu0 0
  %552 = vmatpush1.bf16.msra.mxu0 %v531
  %553 = vmatprep.subr.bf16.mxu0 0
  %554 = vmatpush1.bf16.msra.mxu0 %v530
  %555 = vmatprep.subr.bf16.mxu0 0
  %556 = vmatpush2.bf16.msra.mxu0 0
  %557 = vmatprep.subr.bf16.mxu0 0
  %558 = vmatpush2.bf16.msra.mxu0 0
  %559 = vmatprep.subr.bf16.mxu0 0
  %560 = vmatpush2.bf16.msra.mxu0 0
  %561 = vmatprep.subr.bf16.mxu0 0
  %562 = vmatpush2.bf16.msra.mxu0 0
  %563 = vmatprep.subr.bf16.mxu0 0
  %564 = vmatpush2.bf16.msra.mxu0 0
  %565 = vmatprep.subr.bf16.mxu0 0
  %566 = vmatpush2.bf16.msra.mxu0 0
  %567 = vmatprep.subr.bf16.mxu0 0
  %568 = vmatpush2.bf16.msra.mxu0 0
  %569 = vmatprep.subr.bf16.mxu0 0
  %570 = vmatpush2.bf16.msra.mxu0 0
  %571 = vmatprep.mubr.bf16.mxu0 0
  %572 = vmatmul.mubr.bf16.gmra.mxu0 %v534
  %v573 = vpop.f32.mrf.mxu0
  %v574 = vadd.f32 %v516, %v573
  %v575 = vpop.f32.mrf.mxu0
  %v576 = vpop.f32.mrf.mxu0
  %v577 = vadd.f32 %v519, %v576
  %v578 = vpop.f32.mrf.mxu0
  %579 = vmatprep.mubr.bf16.mxu0 0
  %580 = vmatmul.mubr.bf16.gmra.mxu0 %v537
  %v581 = vpop.f32.mrf.mxu0
  %v582 = vadd.f32 %v524, %v581
  %v583 = vpop.f32.mrf.mxu0
  %v584 = vpop.f32.mrf.mxu0
  %v585 = vadd.f32 %v527, %v584
  %v586 = vpop.f32.mrf.mxu0
  %587 = vdwg.mxu0
  %v588 = vld [vmem:[%s4] sm:$0xf]
  %v589 = vld [vmem:[%s4 + $0x4] sm:$0xf]
  %v590 = vld [vmem:[%s4 + $0x8] sm:$0xf]
  %v591 = vld [vmem:[%s4 + $0xc] sm:$0xf]
  %v592 = vpack.c.bf16 %v577, %v574
  %v593 = vpack.c.bf16 %v585, %v582
  %s594 = scalar_lea.vmem %s6, 1
  %v595 = vld [vmem:[%s594] sm:$0x1]
  %v597 = vlaneseq
  %v598 = vshrl.u32 %v597, 7
  %v599 = vsub.s32 0, %v598
  %v600 = vrot.slane %v595, %v599
  %v606 = vunpack.c.l.b16 %v588
  %v607 = vunpack.c.l.b16 %v589
  %v608 = vunpack.c.l.b16 %v590
  %v609 = vunpack.c.l.b16 %v591
  %v610 = vpack.c.b16 %v607, %v606
  %v611 = vpack.c.b16 %v609, %v608
  %v615 = vsel %vm532, %v592, 0
  %v618 = vsel %vm532, %v593, 0
  %620 = vmatprep.subr.bf16.mxu0 0
  %621 = vmatpush1.bf16.msra.mxu0 0
  %622 = vmatprep.subr.bf16.mxu0 0
  %623 = vmatpush1.bf16.msra.mxu0 0
  %624 = vmatprep.subr.bf16.mxu0 0
  %625 = vmatpush1.bf16.msra.mxu0 0
  %626 = vmatprep.subr.bf16.mxu0 0
  %627 = vmatpush1.bf16.msra.mxu0 0
  %628 = vmatprep.subr.bf16.mxu0 0
  %629 = vmatpush1.bf16.msra.mxu0 0
  %630 = vmatprep.subr.bf16.mxu0 0
  %631 = vmatpush1.bf16.msra.mxu0 0
  %632 = vmatprep.subr.bf16.mxu0 0
  %633 = vmatpush1.bf16.msra.mxu0 %v611
  %634 = vmatprep.subr.bf16.mxu0 0
  %635 = vmatpush1.bf16.msra.mxu0 %v610
  %636 = vmatprep.subr.bf16.mxu0 0
  %637 = vmatpush2.bf16.msra.mxu0 0
  %638 = vmatprep.subr.bf16.mxu0 0
  %639 = vmatpush2.bf16.msra.mxu0 0
  %640 = vmatprep.subr.bf16.mxu0 0
  %641 = vmatpush2.bf16.msra.mxu0 0
  %642 = vmatprep.subr.bf16.mxu0 0
  %643 = vmatpush2.bf16.msra.mxu0 0
  %644 = vmatprep.subr.bf16.mxu0 0
  %645 = vmatpush2.bf16.msra.mxu0 0
  %646 = vmatprep.subr.bf16.mxu0 0
  %647 = vmatpush2.bf16.msra.mxu0 0
  %648 = vmatprep.subr.bf16.mxu0 0
  %649 = vmatpush2.bf16.msra.mxu0 0
  %650 = vmatprep.subr.bf16.mxu0 0
  %651 = vmatpush2.bf16.msra.mxu0 0
  %652 = vmatprep.mubr.bf16.mxu0 0
  %653 = vmatmul.mubr.bf16.gmra.mxu0 %v615
  %v654 = vpop.f32.mrf.mxu0
  %v655 = vadd.f32 %v600, %v654
  %v656 = vpop.f32.mrf.mxu0
  %v657 = vpop.f32.mrf.mxu0
  %v658 = vadd.f32 %v600, %v657
  %v659 = vpop.f32.mrf.mxu0
  %660 = vmatprep.mubr.bf16.mxu0 0
  %661 = vmatmul.mubr.bf16.gmra.mxu0 %v618
  %v662 = vpop.f32.mrf.mxu0
  %v663 = vadd.f32 %v600, %v662
  %v664 = vpop.f32.mrf.mxu0
  %v665 = vpop.f32.mrf.mxu0
  %v666 = vadd.f32 %v600, %v665
  %v667 = vpop.f32.mrf.mxu0
  %668 = vdwg.mxu0
  %v669 = vmax.f32 %v655, 0.0
  %v670 = vmax.f32 %v658, 0.0
  %v671 = vmax.f32 %v663, 0.0
  %v672 = vmax.f32 %v666, 0.0
  %v673 = vadd.f32 %v243, %v669
  %v674 = vadd.f32 %v244, %v670
  %v675 = vadd.f32 %v245, %v671
  %v676 = vadd.f32 %v246, %v672
  %v677 = vpack.c.bf16 %v674, %v673
  %v678 = vpack.c.bf16 %v676, %v675
  %679 = vmatprep.subr.bf16.mxu0 0
  %680 = vmatpush1.bf16.msra.mxu0 0
  %681 = vmatprep.subr.bf16.mxu0 0
  %682 = vmatpush1.bf16.msra.mxu0 0
  %683 = vmatprep.subr.bf16.mxu0 0
  %684 = vmatpush1.bf16.msra.mxu0 0
  %685 = vmatprep.subr.bf16.mxu0 0
  %686 = vmatpush1.bf16.msra.mxu0 0
  %687 = vmatprep.subr.bf16.mxu0 0
  %688 = vmatpush1.bf16.msra.mxu0 0
  %689 = vmatprep.subr.bf16.mxu0 0
  %690 = vmatpush1.bf16.msra.mxu0 0
  %691 = vmatprep.subr.bf16.mxu0 0
  %692 = vmatpush1.bf16.msra.mxu0 %v678
  %693 = vmatprep.subr.bf16.mxu0 0
  %694 = vmatpush1.bf16.msra.mxu0 %v677
  %695 = vmatprep.subr.bf16.mxu0 0
  %696 = vmatpush2.bf16.msra.mxu0 0
  %697 = vmatprep.subr.bf16.mxu0 0
  %698 = vmatpush2.bf16.msra.mxu0 0
  %699 = vmatprep.subr.bf16.mxu0 0
  %700 = vmatpush2.bf16.msra.mxu0 0
  %701 = vmatprep.subr.bf16.mxu0 0
  %702 = vmatpush2.bf16.msra.mxu0 0
  %703 = vmatprep.subr.bf16.mxu0 0
  %704 = vmatpush2.bf16.msra.mxu0 0
  %705 = vmatprep.subr.bf16.mxu0 0
  %706 = vmatpush2.bf16.msra.mxu0 0
  %707 = vmatprep.subr.bf16.mxu0 0
  %708 = vmatpush2.bf16.msra.mxu0 0
  %709 = vmatprep.subr.bf16.mxu0 0
  %710 = vmatpush2.bf16.msra.mxu0 0
  %711 = vmatprep.mubr.bf16.mxu0 0
  %712 = vmatmul.mubr.bf16.gmra.mxu0 %v534
  %v713 = vpop.f32.mrf.mxu0
  %v714 = vadd.f32 %v516, %v713
  %v715 = vpop.f32.mrf.mxu0
  %v716 = vpop.f32.mrf.mxu0
  %v717 = vadd.f32 %v519, %v716
  %v718 = vpop.f32.mrf.mxu0
  %719 = vmatprep.mubr.bf16.mxu0 0
  %720 = vmatmul.mubr.bf16.gmra.mxu0 %v537
  %v721 = vpop.f32.mrf.mxu0
  %v722 = vadd.f32 %v524, %v721
  %v723 = vpop.f32.mrf.mxu0
  %v724 = vpop.f32.mrf.mxu0
  %v725 = vadd.f32 %v527, %v724
  %v726 = vpop.f32.mrf.mxu0
  %727 = vdwg.mxu0
  %s728 = scalar_lea.vmem %s4, 16
  %v729 = vld [vmem:[%s728] sm:$0xf]
  %v730 = vld [vmem:[%s728 + $0x4] sm:$0xf]
  %v731 = vld [vmem:[%s728 + $0x8] sm:$0xf]
  %v732 = vld [vmem:[%s728 + $0xc] sm:$0xf]
  %v733 = vpack.c.bf16 %v717, %v714
  %v734 = vpack.c.bf16 %v725, %v722
  %s735 = scalar_lea.vmem %s6, 2
  %v736 = vld [vmem:[%s735] sm:$0x1]
  %v738 = vlaneseq
  %v739 = vshrl.u32 %v738, 7
  %v740 = vsub.s32 0, %v739
  %v741 = vrot.slane %v736, %v740
  %v747 = vunpack.c.l.b16 %v729
  %v748 = vunpack.c.l.b16 %v730
  %v749 = vunpack.c.l.b16 %v731
  %v750 = vunpack.c.l.b16 %v732
  %v751 = vpack.c.b16 %v748, %v747
  %v752 = vpack.c.b16 %v750, %v749
  %v756 = vsel %vm532, %v733, 0
  %v759 = vsel %vm532, %v734, 0
  %761 = vmatprep.subr.bf16.mxu0 0
  %762 = vmatpush1.bf16.msra.mxu0 0
  %763 = vmatprep.subr.bf16.mxu0 0
  %764 = vmatpush1.bf16.msra.mxu0 0
  %765 = vmatprep.subr.bf16.mxu0 0
  %766 = vmatpush1.bf16.msra.mxu0 0
  %767 = vmatprep.subr.bf16.mxu0 0
  %768 = vmatpush1.bf16.msra.mxu0 0
  %769 = vmatprep.subr.bf16.mxu0 0
  %770 = vmatpush1.bf16.msra.mxu0 0
  %771 = vmatprep.subr.bf16.mxu0 0
  %772 = vmatpush1.bf16.msra.mxu0 0
  %773 = vmatprep.subr.bf16.mxu0 0
  %774 = vmatpush1.bf16.msra.mxu0 %v752
  %775 = vmatprep.subr.bf16.mxu0 0
  %776 = vmatpush1.bf16.msra.mxu0 %v751
  %777 = vmatprep.subr.bf16.mxu0 0
  %778 = vmatpush2.bf16.msra.mxu0 0
  %779 = vmatprep.subr.bf16.mxu0 0
  %780 = vmatpush2.bf16.msra.mxu0 0
  %781 = vmatprep.subr.bf16.mxu0 0
  %782 = vmatpush2.bf16.msra.mxu0 0
  %783 = vmatprep.subr.bf16.mxu0 0
  %784 = vmatpush2.bf16.msra.mxu0 0
  %785 = vmatprep.subr.bf16.mxu0 0
  %786 = vmatpush2.bf16.msra.mxu0 0
  %787 = vmatprep.subr.bf16.mxu0 0
  %788 = vmatpush2.bf16.msra.mxu0 0
  %789 = vmatprep.subr.bf16.mxu0 0
  %790 = vmatpush2.bf16.msra.mxu0 0
  %791 = vmatprep.subr.bf16.mxu0 0
  %792 = vmatpush2.bf16.msra.mxu0 0
  %793 = vmatprep.mubr.bf16.mxu0 0
  %794 = vmatmul.mubr.bf16.gmra.mxu0 %v756
  %v795 = vpop.f32.mrf.mxu0
  %v796 = vadd.f32 %v741, %v795
  %v797 = vpop.f32.mrf.mxu0
  %v798 = vpop.f32.mrf.mxu0
  %v799 = vadd.f32 %v741, %v798
  %v800 = vpop.f32.mrf.mxu0
  %801 = vmatprep.mubr.bf16.mxu0 0
  %802 = vmatmul.mubr.bf16.gmra.mxu0 %v759
  %v803 = vpop.f32.mrf.mxu0
  %v804 = vadd.f32 %v741, %v803
  %v805 = vpop.f32.mrf.mxu0
  %v806 = vpop.f32.mrf.mxu0
  %v807 = vadd.f32 %v741, %v806
  %v808 = vpop.f32.mrf.mxu0
  %809 = vdwg.mxu0
  %v810 = vmax.f32 %v796, 0.0
  %v811 = vmax.f32 %v799, 0.0
  %v812 = vmax.f32 %v804, 0.0
  %v813 = vmax.f32 %v807, 0.0
  %v814 = vadd.f32 %v673, %v810
  %v815 = vadd.f32 %v674, %v811
  %v816 = vadd.f32 %v675, %v812
  %v817 = vadd.f32 %v676, %v813
  %818 = vset.pattern.permute.xlu0 0
  %819 = vperm.xlu0 %818, %v46
  %v820 = vpop.permute.xlu0 %819
  %v821 = vlaneseq
  %v822 = vshrl.u32 %v821, 7
  %v823 = vsub.s32 0, %v822
  %v824 = vrot.slane %v51, %v823
  %vm825 = vcmp.eq.s32.totalorder %v820, %v824
  %v826 = vsel %vm825, 1, 0
  %v827 = vcvt.s32.f32 %v826
  %v828 = vpack.c.bf16 %v827, %v827
  %829 = vset.pattern.permute.xlu0 0
  %830 = vperm.xlu0 %829, %v48
  %v831 = vpop.permute.xlu0 %830
  %vm832 = vcmp.eq.s32.totalorder %v831, %v824
  %v833 = vsel %vm832, 1, 0
  %v834 = vcvt.s32.f32 %v833
  %v835 = vpack.c.bf16 %v834, %v834
  %v836 = vpack.c.bf16 %v815, %v814
  %v837 = vpack.c.bf16 %v817, %v816
  %v839 = vsel %vm532, %v828, 0
  %841 = vmatprep.subr.bf16.mxu0 0
  %842 = vmatpush1.bf16.msra.mxu0 0
  %843 = vmatprep.subr.bf16.mxu0 0
  %844 = vmatpush1.bf16.msra.mxu0 0
  %845 = vmatprep.subr.bf16.mxu0 0
  %846 = vmatpush1.bf16.msra.mxu0 0
  %847 = vmatprep.subr.bf16.mxu0 0
  %848 = vmatpush1.bf16.msra.mxu0 0
  %849 = vmatprep.subr.bf16.mxu0 0
  %850 = vmatpush1.bf16.msra.mxu0 0
  %851 = vmatprep.subr.bf16.mxu0 0
  %852 = vmatpush1.bf16.msra.mxu0 0
  %853 = vmatprep.subr.bf16.mxu0 0
  %854 = vmatpush1.bf16.msra.mxu0 %v837
  %855 = vmatprep.subr.bf16.mxu0 0
  %856 = vmatpush1.bf16.msra.mxu0 %v836
  %857 = vmatprep.subr.bf16.mxu0 0
  %858 = vmatpush2.bf16.msra.mxu0 0
  %859 = vmatprep.subr.bf16.mxu0 0
  %860 = vmatpush2.bf16.msra.mxu0 0
  %861 = vmatprep.subr.bf16.mxu0 0
  %862 = vmatpush2.bf16.msra.mxu0 0
  %863 = vmatprep.subr.bf16.mxu0 0
  %864 = vmatpush2.bf16.msra.mxu0 0
  %865 = vmatprep.subr.bf16.mxu0 0
  %866 = vmatpush2.bf16.msra.mxu0 0
  %867 = vmatprep.subr.bf16.mxu0 0
  %868 = vmatpush2.bf16.msra.mxu0 0
  %869 = vmatprep.subr.bf16.mxu0 0
  %870 = vmatpush2.bf16.msra.mxu0 0
  %871 = vmatprep.subr.bf16.mxu0 0
  %872 = vmatpush2.bf16.msra.mxu0 0
  %873 = vmatprep.mubr.bf16.mxu0 0
  %874 = vmatmul.mubr.bf16.gmra.mxu0 %v839
  %v875 = vpop.f32.mrf.mxu0
  %v876 = vadd.f32 0.0, %v875
  %v877 = vpop.f32.mrf.mxu0
  %v878 = vpop.f32.mrf.mxu0
  %v879 = vpop.f32.mrf.mxu0
  %880 = vdwg.mxu0
  %v882 = vsel %vm532, %v835, 0
  %884 = vmatprep.subr.bf16.mxu0 0
  %885 = vmatpush1.bf16.msra.mxu0 0
  %886 = vmatprep.subr.bf16.mxu0 0
  %887 = vmatpush1.bf16.msra.mxu0 0
  %888 = vmatprep.subr.bf16.mxu0 0
  %889 = vmatpush1.bf16.msra.mxu0 0
  %890 = vmatprep.subr.bf16.mxu0 0
  %891 = vmatpush1.bf16.msra.mxu0 0
  %892 = vmatprep.subr.bf16.mxu0 0
  %893 = vmatpush1.bf16.msra.mxu0 0
  %894 = vmatprep.subr.bf16.mxu0 0
  %895 = vmatpush1.bf16.msra.mxu0 0
  %896 = vmatprep.subr.bf16.mxu0 0
  %897 = vmatpush1.bf16.msra.mxu0 %v837
  %898 = vmatprep.subr.bf16.mxu0 0
  %899 = vmatpush1.bf16.msra.mxu0 %v836
  %900 = vmatprep.subr.bf16.mxu0 0
  %901 = vmatpush2.bf16.msra.mxu0 0
  %902 = vmatprep.subr.bf16.mxu0 0
  %903 = vmatpush2.bf16.msra.mxu0 0
  %904 = vmatprep.subr.bf16.mxu0 0
  %905 = vmatpush2.bf16.msra.mxu0 0
  %906 = vmatprep.subr.bf16.mxu0 0
  %907 = vmatpush2.bf16.msra.mxu0 0
  %908 = vmatprep.subr.bf16.mxu0 0
  %909 = vmatpush2.bf16.msra.mxu0 0
  %910 = vmatprep.subr.bf16.mxu0 0
  %911 = vmatpush2.bf16.msra.mxu0 0
  %912 = vmatprep.subr.bf16.mxu0 0
  %913 = vmatpush2.bf16.msra.mxu0 0
  %914 = vmatprep.subr.bf16.mxu0 0
  %915 = vmatpush2.bf16.msra.mxu0 0
  %916 = vmatprep.mubr.bf16.mxu0 0
  %917 = vmatmul.mubr.bf16.gmra.mxu0 %v882
  %v918 = vpop.f32.mrf.mxu0
  %v919 = vadd.f32 0.0, %v918
  %v920 = vpop.f32.mrf.mxu0
  %v921 = vpop.f32.mrf.mxu0
  %v922 = vpop.f32.mrf.mxu0
  %923 = vdwg.mxu0
  %v924 = vpack.c.bf16 %v876, %v876
  %v929 = vunpack.c.l.b16 %v60
  %v930 = vunpack.c.l.b16 %v61
  %v931 = vunpack.c.l.b16 %v62
  %v932 = vunpack.c.l.b16 %v63
  %v933 = vpack.c.b16 %v930, %v929
  %v934 = vpack.c.b16 %v932, %v931
  %v938 = vsel %vm532, %v924, 0
  %940 = vmatprep.subr.bf16.mxu0 0
  %941 = vmatpush1.bf16.msra.mxu0 0
  %942 = vmatprep.subr.bf16.mxu0 0
  %943 = vmatpush1.bf16.msra.mxu0 0
  %944 = vmatprep.subr.bf16.mxu0 0
  %945 = vmatpush1.bf16.msra.mxu0 0
  %946 = vmatprep.subr.bf16.mxu0 0
  %947 = vmatpush1.bf16.msra.mxu0 0
  %948 = vmatprep.subr.bf16.mxu0 0
  %949 = vmatpush1.bf16.msra.mxu0 0
  %950 = vmatprep.subr.bf16.mxu0 0
  %951 = vmatpush1.bf16.msra.mxu0 0
  %952 = vmatprep.subr.bf16.mxu0 0
  %953 = vmatpush1.bf16.msra.mxu0 %v934
  %954 = vmatprep.subr.bf16.mxu0 0
  %955 = vmatpush1.bf16.msra.mxu0 %v933
  %956 = vmatprep.subr.bf16.mxu0 0
  %957 = vmatpush2.bf16.msra.mxu0 0
  %958 = vmatprep.subr.bf16.mxu0 0
  %959 = vmatpush2.bf16.msra.mxu0 0
  %960 = vmatprep.subr.bf16.mxu0 0
  %961 = vmatpush2.bf16.msra.mxu0 0
  %962 = vmatprep.subr.bf16.mxu0 0
  %963 = vmatpush2.bf16.msra.mxu0 0
  %964 = vmatprep.subr.bf16.mxu0 0
  %965 = vmatpush2.bf16.msra.mxu0 0
  %966 = vmatprep.subr.bf16.mxu0 0
  %967 = vmatpush2.bf16.msra.mxu0 0
  %968 = vmatprep.subr.bf16.mxu0 0
  %969 = vmatpush2.bf16.msra.mxu0 0
  %970 = vmatprep.subr.bf16.mxu0 0
  %971 = vmatpush2.bf16.msra.mxu0 0
  %972 = vmatprep.mubr.bf16.mxu0 0
  %973 = vmatmul.mubr.bf16.gmra.mxu0 %v938
  %v974 = vpop.f32.mrf.mxu0
  %v975 = vadd.f32 0.0, %v974
  %v976 = vpop.f32.mrf.mxu0
  %v977 = vpop.f32.mrf.mxu0
  %v978 = vpop.f32.mrf.mxu0
  %979 = vdwg.mxu0
  %v980 = vpack.c.bf16 %v919, %v919
  %v985 = vunpack.c.l.b16 %v65
  %v986 = vunpack.c.l.b16 %v66
  %v987 = vunpack.c.l.b16 %v67
  %v988 = vunpack.c.l.b16 %v68
  %v989 = vpack.c.b16 %v986, %v985
  %v990 = vpack.c.b16 %v988, %v987
  %v994 = vsel %vm532, %v980, 0
  %996 = vmatprep.subr.bf16.mxu0 0
  %997 = vmatpush1.bf16.msra.mxu0 0
  %998 = vmatprep.subr.bf16.mxu0 0
  %999 = vmatpush1.bf16.msra.mxu0 0
  %1000 = vmatprep.subr.bf16.mxu0 0
  %1001 = vmatpush1.bf16.msra.mxu0 0
  %1002 = vmatprep.subr.bf16.mxu0 0
  %1003 = vmatpush1.bf16.msra.mxu0 0
  %1004 = vmatprep.subr.bf16.mxu0 0
  %1005 = vmatpush1.bf16.msra.mxu0 0
  %1006 = vmatprep.subr.bf16.mxu0 0
  %1007 = vmatpush1.bf16.msra.mxu0 0
  %1008 = vmatprep.subr.bf16.mxu0 0
  %1009 = vmatpush1.bf16.msra.mxu0 %v990
  %1010 = vmatprep.subr.bf16.mxu0 0
  %1011 = vmatpush1.bf16.msra.mxu0 %v989
  %1012 = vmatprep.subr.bf16.mxu0 0
  %1013 = vmatpush2.bf16.msra.mxu0 0
  %1014 = vmatprep.subr.bf16.mxu0 0
  %1015 = vmatpush2.bf16.msra.mxu0 0
  %1016 = vmatprep.subr.bf16.mxu0 0
  %1017 = vmatpush2.bf16.msra.mxu0 0
  %1018 = vmatprep.subr.bf16.mxu0 0
  %1019 = vmatpush2.bf16.msra.mxu0 0
  %1020 = vmatprep.subr.bf16.mxu0 0
  %1021 = vmatpush2.bf16.msra.mxu0 0
  %1022 = vmatprep.subr.bf16.mxu0 0
  %1023 = vmatpush2.bf16.msra.mxu0 0
  %1024 = vmatprep.subr.bf16.mxu0 0
  %1025 = vmatpush2.bf16.msra.mxu0 0
  %1026 = vmatprep.subr.bf16.mxu0 0
  %1027 = vmatpush2.bf16.msra.mxu0 0
  %1028 = vmatprep.mubr.bf16.mxu0 0
  %1029 = vmatmul.mubr.bf16.gmra.mxu0 %v994
  %v1030 = vpop.f32.mrf.mxu0
  %v1031 = vadd.f32 0.0, %v1030
  %v1032 = vpop.f32.mrf.mxu0
  %v1033 = vpop.f32.mrf.mxu0
  %v1034 = vpop.f32.mrf.mxu0
  %1035 = vdwg.mxu0
  %v1036 = vsub.f32 %v975, %v1031
  %v1038 = vlaneseq
  %v1039 = vshrl.u32 %v1038, 7
  %v1040 = vsub.s32 0, %v1039
  %v1041 = vrot.slane %v71, %v1040
  %v1043 = vadd.f32 %v1036, %v1041
  %v1044 = vmul.f32 %v1043, %v1043
  %vm1045 = vcmask 257024
  %v1046 = vsel %vm1045, %v1044, 0.0
  %1047 = vadd.xlane.f32.xlu0 %v1046
  %v1048 = vpop.xlane.xlu0 %1047
  %v1049 = vrsqrt.pop %v1048
  %v1050 = vmul.f32 %v1048, %v1049
  %vm1051 = vcmp.eq.f32.partialorder %v1048, inf
  %v1052 = vsel %vm1051, %v1048, %v1050
  %vm1053 = vcmp.eq.f32.partialorder %v1048, 0.0
  %v1054 = vand.u32 %v1048, 2147483648
  %v1055 = vsel %vm1053, %v1054, %v1052
  %vm1056 = vcmp.eq.s32.totalorder %v398, %v73
  %v1057 = vadd.s32 %v73, 2
  %vm1058 = vcmp.eq.s32.totalorder %v398, %v1057
  %vm1059 = vmor %vm1056, %vm1058
  %vm1060 = vcmp.lt.s32.totalorder %v73, 2
  %vm1061 = vmand %vm1059, %vm1060
  %v1062 = vsel %vm1061, 1, 0
  %v1063 = vcvt.s32.f32 %v1062
  %v1064 = vmul.f32 %v1055, %v1063
  %vm1065 = vcmask 1043456
  %v1066 = vsel %vm1065, %v1064, 0.0
  %v1067 = vrot.slane %v1066, 4
  %v1068 = vadd.f32 %v1066, %v1067
  %v1069 = vrot.slane %v1068, 2
  %v1070 = vadd.f32 %v1068, %v1069
  %v1071 = vrot.slane %v1070, 1
  %v1072 = vadd.f32 %v1070, %v1071
  %1073 = vst [vmem:[%s7] sm:$0x1] %v1072
  // Predicated region
  $region30: #{ddi_forward.1} parent=0 // pred_check
    _
  $region31: #{ddi_forward.1} parent=0 // pred_check_branch
    %1075 = sbr.rel (0) target = $region33
  $region32: #{ddi_forward.1} parent=0 // pred_region
    _
  $region33: #{ddi_forward.1} parent=0 // pred_fallthru
    _
  // Predicated region
  $region34: #{ddi_forward.1} parent=0 // pred_check
    _
  $region35: #{ddi_forward.1} parent=0 // pred_check_branch
    %1077 = sbr.rel (0) target = $region37
  $region36: #{ddi_forward.1} parent=0 // pred_region
    _
  $region37: #{ddi_forward.1} parent=0 // pred_fallthru
    _

</llo_original>
